<compile_context>
chip_gen: v6e
topology: v6e:2x2x1
jax: 0.10.0
libtpu: 0.0.40
codegen_flags: <defaults>
</compile_context>

<pallas_src>
import jax
import jax.numpy as jnp
from jax import lax
from jax.experimental import pallas as pl
from jax.experimental.pallas import tpu as pltpu


def _round_up(x: int, m: int) -> int:
    return ((x + m - 1) // m) * m


def ce_loss_kernel(logits_ref, gt_ref, loss_ref):
    """One row-tile: accumulate masked CE loss-sum into the resident output block."""
    i = pl.program_id(1)

    @pl.when(i == 0)
    def _init():
        loss_ref[...] = jnp.zeros_like(loss_ref)

    logits = logits_ref[...]            # (tr, C) native dtype (bf16 or f32)
    gt = gt_ref[...]                    # (tr, 1) int32; -1 marks padded / OOB rows
    tr, c = logits.shape

    # Numerically stable logsumexp over the class (lane) axis.
    # Row max in native dtype (exact); exp / sum / log in f32 for accuracy.
    m32 = jnp.max(logits, axis=-1, keepdims=True).astype(jnp.float32)      # (tr, 1)
    p = jnp.exp(logits.astype(jnp.float32) - m32)                          # (tr, C) f32
    lse = m32 + jnp.log(jnp.sum(p, axis=-1, keepdims=True))                # (tr, 1)

    # Target-logit gather via fused select-and-reduce (no f32 one-hot; exact in
    # native dtype because exactly one element per row survives the select).
    class_iota = lax.broadcasted_iota(jnp.int32, (tr, c), 1)
    gt_logit = jnp.sum(
        jnp.where(class_iota == gt, logits, jnp.zeros_like(logits)),
        axis=-1, keepdims=True).astype(jnp.float32)                        # (tr, 1)

    per_row = lse - gt_logit                                               # (tr, 1)

    # gt == -1 rows (padding / logits-OOB overhang) contribute exactly 0; the
    # select form guarantees inf/NaN garbage in discarded rows cannot leak in.
    valid = gt >= 0
    loss_ref[...] += jnp.sum(jnp.where(valid, per_row, 0.0)).reshape(1, 1, 1)


def ce_loss(preds_logits, gt, lens, *, max_row_tile=4096,
            vmem_budget_bytes=32 * 1024 * 1024, num_core_slices=2):
    """Masked mean cross-entropy; returns a scalar float32."""
    B, T, C = preds_logits.shape
    N = B * T
    itemsize = jnp.dtype(preds_logits.dtype).itemsize

    # Row-tile size: multiple of 8; budget accounts for double-buffered native
    # input tile + the f32 exp temp + the int32 iota/select temp per in-flight tile.
    per_row_bytes = C * (2 * itemsize + 8) + 32
    rows_fit = max(8, (vmem_budget_bytes // per_row_bytes) // 8 * 8)
    tr = min(max_row_tile, rows_fit, _round_up(N, 8))
    tr = max(8, (tr // 8) * 8)

    num_tiles = pl.cdiv(N, tr)
    slices = min(num_core_slices, num_tiles)            # v7x: 2; degenerate inputs: 1
    tpc = pl.cdiv(num_tiles, slices)                    # tiles per core-slice
    total_tiles = slices * tpc
    n_rows_padded = total_tiles * tr

    # Logits stay unpadded in native dtype (no HBM re-copy); only the tiny gt
    # array is padded, with -1 marking every padded / overhang row.
    logits2d = preds_logits.reshape(N, C)
    valid_mask = (jnp.arange(T, dtype=jnp.int32)[None, :]
                  < lens.astype(jnp.int32)[:, None])                        # (B, T) bool
    gt2d = jnp.where(valid_mask, gt.astype(jnp.int32), -1).reshape(N, 1)
    pad_rows = n_rows_padded - N
    if pad_rows:
        gt2d = jnp.pad(gt2d, ((0, pad_rows), (0, 0)), constant_values=-1)

    # Exact denominator, computed in the wrapper (kernel only produces the sum).
    count = jnp.sum(valid_mask.astype(jnp.float32))

    last_tile = num_tiles - 1

    def logits_map(c, i):
        # Clamp so excess iterations (when slices * tpc > num_tiles) never issue
        # a fully out-of-bounds DMA; their gt rows are -1 so they contribute 0.
        return (jnp.minimum(c * tpc + i, last_tile), 0)

    def gt_map(c, i):
        return (c * tpc + i, 0)          # padded gt is always fully in-bounds

    cost = pl.CostEstimate(
        flops=6 * N * C,
        transcendentals=N * C,
        bytes_accessed=N * C * itemsize + n_rows_padded * 4 + slices * 4,
    )

    partial = pl.pallas_call(
        ce_loss_kernel,
        out_shape=jax.ShapeDtypeStruct((slices, 1, 1), jnp.float32),
        grid=(slices, tpc),
        in_specs=[
            pl.BlockSpec((tr, C), logits_map),
            pl.BlockSpec((tr, 1), gt_map),
        ],
        # Output block index depends only on the core-slice axis -> stays
        # resident in VMEM across the inner (reduction) axis and acts as the
        # per-slice accumulator.
        out_specs=pl.BlockSpec((1, 1, 1), lambda c, i: (c, 0, 0)),
        compiler_params=pltpu.CompilerParams(
            dimension_semantics=("parallel", "arbitrary"),
            vmem_limit_bytes=48 * 1024 * 1024,   # safe on v5e/v6e/v7x physical VMEM
        ),
        cost_estimate=cost,
    )(logits2d, gt2d)

    # NOTE: matches the PyTorch reference; an all-padded batch (count == 0)
    # is degenerate in the reference too (yields inf/NaN).
    return jnp.sum(partial) / count


def ce_loss_reference(preds_logits, gt, lens):
    """Pure-JAX reference mirroring the PyTorch module."""
    logits = preds_logits.astype(jnp.float32)
    lse = jax.scipy.special.logsumexp(logits, axis=-1)                       # (B, T)
    gt_logit = jnp.take_along_axis(logits, gt[..., None], axis=-1)[..., 0]   # (B, T)
    per_pos = lse - gt_logit
    T = logits.shape[1]
    mask = jnp.arange(T)[None, :] < lens[:, None]
    return jnp.sum(jnp.where(mask, per_pos, 0.0)) / jnp.sum(mask.astype(jnp.float32))


if __name__ == "__main__":
    key = jax.random.PRNGKey(0)

    # Case 1: small f32, single tile / single slice.
    B, T, C = 2, 8, 32
    k1, k2 = jax.random.split(key)
    preds_logits = jax.random.normal(k1, (B, T, C), dtype=jnp.float32)
    gt = jax.random.randint(k2, (B, T), 0, C, dtype=jnp.int32)
    lens = jnp.array([8, 5], dtype=jnp.int32)   # second sequence padded past t=5

    out = jax.block_until_ready(ce_loss(preds_logits, gt, lens))
    ref = ce_loss_reference(preds_logits, gt, lens)
    assert jnp.allclose(out, ref, rtol=1e-5, atol=1e-5), (out, ref)

    # Case 2: ragged last tile + two-slice grid (N=26, tr=8 -> 4 tiles, 2 slices).
    B2, T2, C2 = 2, 13, 32
    k3, k4 = jax.random.split(k1)
    preds2 = jax.random.normal(k3, (B2, T2, C2), dtype=jnp.float32)
    gt2 = jax.random.randint(k4, (B2, T2), 0, C2, dtype=jnp.int32)
    lens2 = jnp.array([13, 7], dtype=jnp.int32)

    out2 = jax.block_until_ready(ce_loss(preds2, gt2, lens2, max_row_tile=8))
    ref2 = ce_loss_reference(preds2, gt2, lens2)
    assert jnp.allclose(out2, ref2, rtol=1e-5, atol=1e-5), (out2, ref2)

    # Case 3: bf16 logits, odd tile count -> clamped excess iteration on slice 1
    # (N=24, tr=8 -> 3 tiles, 2 slices x 2 tiles-per-slice).
    B3, T3, C3 = 2, 12, 32
    k5, k6 = jax.random.split(k2)
    preds3 = jax.random.normal(k5, (B3, T3, C3), dtype=jnp.float32).astype(jnp.bfloat16)
    gt3 = jax.random.randint(k6, (B3, T3), 0, C3, dtype=jnp.int32)
    lens3 = jnp.array([12, 9], dtype=jnp.int32)

    out3 = jax.block_until_ready(ce_loss(preds3, gt3, lens3, max_row_tile=8))
    ref3 = ce_loss_reference(preds3, gt3, lens3)
    assert jnp.allclose(out3, ref3, rtol=1e-3, atol=1e-3), (out3, ref3)

    print("KERNEL_OK")
</pallas_src>

<mosaic_0001>
module attributes {stable_mosaic.version = 11 : i64} {
  func.func @ce_loss_kernel(%arg0: i32, %arg1: i32, %arg2: memref<16x32xf32, #tpu.memory_space<vmem>>, %arg3: memref<16x1xi32, #tpu.memory_space<vmem>>, %arg4: memref<1x1x1xf32, #tpu.memory_space<vmem>>) attributes {dimension_semantics = [#tpu.dimension_semantics<parallel>, #tpu.dimension_semantics<arbitrary>], iteration_bounds = array<i64: 1, 1>, scalar_prefetch = 0 : i64, scratch_operands = 0 : i64, tpu.core_type = #tpu.core_type<tc>, window_params = [{transform_indices = @transform_0, window_bounds = array<i64: 16, 32>}, {transform_indices = @transform_1, window_bounds = array<i64: 16, 1>}, {transform_indices = @transform_2, window_bounds = array<i64: 1, 1, 1>}]} {
    %c0_i32 = arith.constant 0 : i32
    %0 = arith.cmpi eq, %arg1, %c0_i32 : i32
    %1 = arith.extui %0 : i1 to i32
    %c0_i32_0 = arith.constant 0 : i32
    %2 = arith.cmpi ne, %1, %c0_i32_0 : i32
    scf.if %2 {
      %cst_16 = arith.constant 0.000000e+00 : f32
      %34 = vector.broadcast %cst_16 : f32 to vector<1x1x1xf32>
      %c0_17 = arith.constant 0 : index
      %c0_18 = arith.constant 0 : index
      %c0_19 = arith.constant 0 : index
      %35 = vector.load %arg4[%c0_17, %c0_18, %c0_19] : memref<1x1x1xf32, #tpu.memory_space<vmem>>, vector<1x1x1xf32>
      tpu.vector_store %arg4[%c0_17, %c0_18, %c0_19], %34 {strides = array<i32>} : memref<1x1x1xf32, #tpu.memory_space<vmem>>, vector<1x1x1xf32>,
    } else {
    }
    %c0 = arith.constant 0 : index
    %c0_1 = arith.constant 0 : index
    %3 = vector.load %arg2[%c0, %c0_1] : memref<16x32xf32, #tpu.memory_space<vmem>>, vector<16x32xf32>
    %c0_2 = arith.constant 0 : index
    %c0_3 = arith.constant 0 : index
    %4 = vector.load %arg3[%c0_2, %c0_3] : memref<16x1xi32, #tpu.memory_space<vmem>>, vector<16x1xi32>
    %cst = arith.constant dense<0xFF800000> : vector<16xf32>
    %5 = vector.multi_reduction <maximumf>, %3, %cst [1] : vector<16x32xf32> to vector<16xf32>
    %6 = vector.shape_cast %5 : vector<16xf32> to vector<16x1xf32>
    %7 = vector.broadcast %6 : vector<16x1xf32> to vector<16x32xf32>
    %8 = arith.subf %3, %7 : vector<16x32xf32>
    %9 = math.exp %8 : vector<16x32xf32>
    %cst_4 = arith.constant dense<0.000000e+00> : vector<16xf32>
    %10 = vector.multi_reduction <add>, %9, %cst_4 [1] : vector<16x32xf32> to vector<16xf32>
    %11 = vector.shape_cast %10 : vector<16xf32> to vector<16x1xf32>
    %12 = math.log %11 : vector<16x1xf32>
    %13 = arith.addf %6, %12 : vector<16x1xf32>
    %14 = tpu.iota {dimensions = array<i32: 1>} : vector<16x32xi32>
    %15 = vector.broadcast %4 : vector<16x1xi32> to vector<16x32xi32>
    %16 = arith.cmpi eq, %14, %15 : vector<16x32xi32>
    %cst_5 = arith.constant 0.000000e+00 : f32
    %17 = vector.broadcast %cst_5 : f32 to vector<16x32xf32>
    %18 = arith.select %16, %3, %17 : vector<16x32xi1>, vector<16x32xf32>
    %cst_6 = arith.constant dense<0.000000e+00> : vector<16xf32>
    %19 = vector.multi_reduction <add>, %18, %cst_6 [1] : vector<16x32xf32> to vector<16xf32>
    %20 = vector.shape_cast %19 : vector<16xf32> to vector<16x1xf32>
    %21 = arith.subf %13, %20 : vector<16x1xf32>
    %c0_i32_7 = arith.constant 0 : i32
    %22 = vector.broadcast %c0_i32_7 : i32 to vector<16x1xi32>
    %23 = arith.cmpi sge, %4, %22 : vector<16x1xi32>
    %c0_8 = arith.constant 0 : index
    %c0_9 = arith.constant 0 : index
    %c0_10 = arith.constant 0 : index
    %24 = vector.load %arg4[%c0_8, %c0_9, %c0_10] : memref<1x1x1xf32, #tpu.memory_space<vmem>>, vector<1x1x1xf32>
    %cst_11 = arith.constant 0.000000e+00 : f32
    %25 = vector.broadcast %cst_11 : f32 to vector<16x1xf32>
    %26 = arith.select %23, %21, %25 : vector<16x1xi1>, vector<16x1xf32>
    %27 = vector.shape_cast %26 : vector<16x1xf32> to vector<1x16x1xf32>
    %cst_12 = arith.constant dense<0.000000e+00> : vector<1xf32>
    %28 = vector.multi_reduction <add>, %27, %cst_12 [1, 2] : vector<1x16x1xf32> to vector<1xf32>
    %29 = vector.shape_cast %28 : vector<1xf32> to vector<1x1x1xf32>
    %30 = vector.extract %29[0, 0, 0] : f32 from vector<1x1x1xf32>
    %31 = vector.broadcast %30 : f32 to vector<1x1x1xf32>
    %32 = arith.addf %24, %31 : vector<1x1x1xf32>
    %c0_13 = arith.constant 0 : index
    %c0_14 = arith.constant 0 : index
    %c0_15 = arith.constant 0 : index
    %33 = vector.load %arg4[%c0_13, %c0_14, %c0_15] : memref<1x1x1xf32, #tpu.memory_space<vmem>>, vector<1x1x1xf32>
    tpu.vector_store %arg4[%c0_13, %c0_14, %c0_15], %32 {strides = array<i32>} : memref<1x1x1xf32, #tpu.memory_space<vmem>>, vector<1x1x1xf32>,
    return
  }
  func.func @transform_0(%arg0: i32, %arg1: i32) -> (i32, i32) {
    %c1_i32 = arith.constant 1 : i32
    %0 = arith.muli %arg0, %c1_i32 : i32
    %1 = arith.addi %0, %arg1 : i32
    %c0_i32 = arith.constant 0 : i32
    %2 = arith.minsi %1, %c0_i32 : i32
    %c0_i32_0 = arith.constant 0 : i32
    %c0_i32_1 = arith.constant 0 : i32
    return %2, %c0_i32_0 : i32, i32
  }
  func.func @transform_1(%arg0: i32, %arg1: i32) -> (i32, i32) {
    %c1_i32 = arith.constant 1 : i32
    %0 = arith.muli %arg0, %c1_i32 : i32
    %1 = arith.addi %0, %arg1 : i32
    %c0_i32 = arith.constant 0 : i32
    %c0_i32_0 = arith.constant 0 : i32
    return %1, %c0_i32 : i32, i32
  }
  func.func @transform_2(%arg0: i32, %arg1: i32) -> (i32, i32, i32) {
    %c0_i32 = arith.constant 0 : i32
    %c0_i32_0 = arith.constant 0 : i32
    %c0_i32_1 = arith.constant 0 : i32
    return %arg0, %c0_i32, %c0_i32_0 : i32, i32, i32
  }
}

</mosaic_0001>

<llo_original>
// kernel: tpu_custom_call.1
$region0: #{tpu_custom_call.1}
  #allocation0 [shape = 'u32[]', space=smem, size = 0x4, offset = 0x4, fixed_abs, tag = 'smem constant byte address 0x4 - core index']
  #allocation1 [shape = 'u32[144,128]{1,0:T(1,128)}', space=vmem, size = 0x12000, scoped, tag = 'internal scratch']
  %s0 = inlined_call_operand.vmem [shape: f32[16,32], index: 0, kind: input, shape index: {}]
  %s1 = inlined_call_operand.vmem [shape: s32[16,1], index: 1, kind: input, shape index: {}]
  %s2 = inlined_call_operand.hbm [shape: f32[1,1,1], index: 2, kind: output, shape index: {}]
  %s3 = sld [smem:[#allocation0]]
  $region22: #{tpu_custom_call.1} parent=0
    _
  %s5 = ssub.s32 1, %s3
  %s6 = scalar_select 0, %s5, %s3
  $region1: #{tpu_custom_call.1} parent=0
    #allocation2 [shape = 'u8[512]{0}', space=vmem, size = 0x400, scoped, tag = 'output window, operand 0, single buffered']
    #allocation3 [shape = 's32[1]{0}', space=sflag, size = 0x4, scoped, tag = 'scoped memory for tpu_custom_call.1']
    %7 = vsyncpa [#allocation3], 0
    // Predicated region
    $region2: #{tpu_custom_call.1} parent=1 // pred_check
      _
    $region3: #{tpu_custom_call.1} parent=1 // pred_check_branch
      %9 = sbr.rel (0) target = $region5
    $region4: #{tpu_custom_call.1} parent=1 // pred_region
      %s10 = sadd.s32 0, 0
      %p11 = scmp.lt.s32.totalorder %s10, 0
      %s12 = scalar_select %p11, %s10, 0
      %s13 = smul.u32 2, %s12
      %p14 = scmp.lt.s32.totalorder %s13, 1
      %s15 = scalar_select %p14, %s13, 1
      %s16 = smul.addr %s15, 8
      %s17 = scalar_lea.vmem %s0, %s16
      %s18 = sadd.s32 0, 0
      %p19 = scmp.lt.s32.totalorder %s18, 0
      %s20 = scalar_select %p19, %s18, 0
      %s21 = smul.u32 2, %s20
    $region5: #{tpu_custom_call.1} parent=1 // pred_fallthru
      _
    // Predicated region
    $region6: #{tpu_custom_call.1} parent=1 // pred_check
      _
    $region7: #{tpu_custom_call.1} parent=1 // pred_check_branch
      %23 = sbr.rel (0) target = $region9
    $region8: #{tpu_custom_call.1} parent=1 // pred_region
      %s24 = sadd.s32 0, 0
      %s25 = smul.u32 2, %s24
      %p26 = scmp.lt.s32.totalorder %s25, 1
      %s27 = scalar_select %p26, %s25, 1
      %s28 = smul.addr %s27, 8
      %s29 = scalar_lea.vmem %s1, %s28
      %s30 = sadd.s32 0, 0
      %s31 = smul.u32 2, %s30
    $region9: #{tpu_custom_call.1} parent=1 // pred_fallthru
      _
    %s32 = sadd.s32 0, 0
    %p33 = scmp.lt.s32.totalorder %s32, 0
    %s34 = scalar_select %p33, %s32, 0
    %s35 = smul.u32 2, %s34
    %p36 = scmp.lt.s32.totalorder %s35, 1
    %s37 = scalar_select %p36, %s35, 1
    %s38 = smul.addr %s37, 8
    %s39 = scalar_lea.vmem %s0, %s38
    %s40 = sadd.s32 0, 0
    %s41 = smul.u32 2, %s40
    %p42 = scmp.lt.s32.totalorder %s41, 1
    %s43 = scalar_select %p42, %s41, 1
    %s44 = smul.addr %s43, 8
    %s45 = scalar_lea.vmem %s1, %s44
    %s46 = sadd.s32 0, 0
    %p47 = scmp.lt.s32.totalorder %s46, 0
    %s48 = scalar_select %p47, %s46, 0
    %s49 = smul.u32 2, %s48
    %p50 = scmp.lt.s32.totalorder %s49, 1
    %s51 = scalar_select %p50, %s49, 1
    %s52 = smul.addr %s51, 8
    %s53 = scalar_lea.vmem %s0, %s52
    %s54 = sadd.s32 0, 0
    %p55 = scmp.lt.s32.totalorder %s54, 0
    %s56 = scalar_select %p55, %s54, 0
    %s57 = smul.u32 2, %s56
    %s58 = sadd.s32 0, 0
    %s59 = smul.u32 2, %s58
    %p60 = scmp.lt.s32.totalorder %s59, 1
    %s61 = scalar_select %p60, %s59, 1
    %s62 = smul.addr %s61, 8
    %s63 = scalar_lea.vmem %s1, %s62
    %s64 = sadd.s32 0, 0
    %s65 = smul.u32 2, %s64
    %p66 = scmp.eq.s32.totalorder 0, 0
    // Predicated region
    $region10: #{tpu_custom_call.1} parent=1 // pred_check
      %p67 = pneg %p66
    $region11: #{tpu_custom_call.1} parent=1 // pred_check_branch
      %69 = sbr.rel (%p67) target = $region13
    $region12: #{tpu_custom_call.1} parent=1 // pred_region
      %vm70 = vcmask 0
      %71 = vst.msk [vmem:[#allocation2] sm:$0x1] %vm70, 0.0
    $region13: #{tpu_custom_call.1} parent=1 // pred_fallthru
      _
    %v72 = vld [vmem:[%s53] sm:$0xff]
    %v73 = vld [vmem:[%s53 + $0x8] sm:$0xff]
    %v74 = vld [vmem:[%s63] sm:$0xff]
    %v75 = vld [vmem:[%s63 + $0x8] sm:$0xff]
    %vm76 = vcmask 261120
    %v77 = vsel %vm76, %v72, -inf
    %78 = vmax.xlane.f32.xlu0 %v77
    %v79 = vpop.xlane.xlu0 %78
    %v80 = vsel %vm76, %v73, -inf
    %81 = vmax.xlane.f32.xlu0 %v80
    %v82 = vpop.xlane.xlu0 %81
    %v83 = vsub.f32 %v72, %v79
    %v84 = vsub.f32 %v73, %v82
    %v85 = vmul.f32 %v83, 1.442695
    %v86 = vpow.pop %v85
    %v87 = vmul.f32 %v84, 1.442695
    %v88 = vpow.pop %v87
    %v89 = vsel %vm76, %v86, 0.0
    %90 = vadd.xlane.f32.xlu0 %v89
    %v91 = vpop.xlane.xlu0 %90
    %v92 = vsel %vm76, %v88, 0.0
    %93 = vadd.xlane.f32.xlu0 %v92
    %v94 = vpop.xlane.xlu0 %93
    %v95 = vlog2.pop %v91
    %v96 = vmul.f32 %v95, 0.6931472
    %v97 = vlog2.pop %v94
    %v98 = vmul.f32 %v97, 0.6931472
    %v99 = vadd.f32 %v79, %v96
    %v100 = vadd.f32 %v82, %v98
    %v101 = vlaneseq
    %v102 = vand.u32 %v101, 127
    %103 = vset.pattern.permute.xlu0 0
    %104 = vperm.xlu0 %103, %v74
    %v105 = vpop.permute.xlu0 %104
    %106 = vset.pattern.permute.xlu0 0
    %107 = vperm.xlu0 %106, %v75
    %v108 = vpop.permute.xlu0 %107
    %vm109 = vcmp.eq.s32.totalorder %v102, %v105
    %vm110 = vcmp.eq.s32.totalorder %v102, %v108
    %v111 = vsel %vm109, %v72, 0.0
    %v112 = vsel %vm110, %v73, 0.0
    %v113 = vsel %vm76, %v111, 0.0
    %114 = vadd.xlane.f32.xlu0 %v113
    %v115 = vpop.xlane.xlu0 %114
    %v116 = vsel %vm76, %v112, 0.0
    %117 = vadd.xlane.f32.xlu0 %v116
    %v118 = vpop.xlane.xlu0 %117
    %v119 = vsub.f32 %v99, %v115
    %v120 = vsub.f32 %v100, %v118
    %vm121 = vcmp.ge.s32.totalorder %v74, 0
    %vm122 = vcmp.ge.s32.totalorder %v75, 0
    %v123 = vld [vmem:[#allocation2] sm:$0x1]
    %v124 = vsel %vm121, %v119, 0.0
    %v125 = vsel %vm122, %v120, 0.0
    %vm126 = vcmask 7168
    %v127 = vsel %vm126, %v124, 0.0
    %v128 = vsel %vm126, %v125, 0.0
    %v129 = vadd.f32 %v127, %v128
    %130 = vadd.xlane.f32.xlu0 %v129
    %v131 = vpop.xlane.xlu0 %130
    %v132 = vrot.slane %v131, 4
    %v133 = vadd.f32 %v131, %v132
    %v134 = vrot.slane %v133, 2
    %v135 = vadd.f32 %v133, %v134
    %v136 = vrot.slane %v135, 1
    %v137 = vadd.f32 %v135, %v136
    %s138 = vtos %v137
    %v139 = vstv %s138
    %v140 = vadd.f32 %v123, %v139
    %vm141 = vcmask 0
    %142 = vst.msk [vmem:[#allocation2] sm:$0x1] %vm141, %v140
    // Predicated region
    $region14: #{tpu_custom_call.1} parent=1 // pred_check
      _
    $region15: #{tpu_custom_call.1} parent=1 // pred_check_branch
      %144 = sbr.rel (0) target = $region17
    $region16: #{tpu_custom_call.1} parent=1 // pred_region
      %s146 = ssub.s32 16, 16
      %147 = vsyncadd [#allocation3], %s146
      %s149 = sshll.u32 [#allocation2], 4
      %s150 = int_to_ptr.vmem [resolvable:$true] %s149
      %152 = dma.vmem_to_hbm [thread:$0]  %s150, 16, %s2, [#allocation3]
    $region17: #{tpu_custom_call.1} parent=1 // pred_fallthru
      _
    // Predicated region
    $region18: #{tpu_custom_call.1} parent=1 // pred_check
      _
    $region19: #{tpu_custom_call.1} parent=1 // pred_check_branch
      %154 = sbr.rel (0) target = $region21
    $region20: #{tpu_custom_call.1} parent=1 // pred_region
      %155 = dma.done [#allocation3], 16
    $region21: #{tpu_custom_call.1} parent=1 // pred_fallthru
      _
    %156 = vsyncpa [#allocation3], 1

</llo_original>
